<compile_context>
chip_gen: v7x
topology: tpu7x:2x2x1
jax: 0.10.0
libtpu: 0.0.40
codegen_flags: <defaults>
</compile_context>

<pallas_src>
import math

import jax
import jax.numpy as jnp
import numpy as np
from jax.experimental import pallas as pl
from jax.experimental.pallas import tpu as pltpu


# ---------------------------------------------------------------------------
# Pallas kernel: pointwise (1x1x1) conv  ==  channel matmul + bias
# ---------------------------------------------------------------------------
def _pointwise_conv_kernel(x_ref, w_ref, b_ref, o_ref):
    # x_ref: (Cin, TS)   spatial tile, channels on sublanes, spatial on lanes
    # w_ref: (Cout, Cin) resident weights
    # b_ref: (Cout, 1)
    # o_ref: (Cout, TS)
    acc = jnp.dot(w_ref[...], x_ref[...], preferred_element_type=jnp.float32)
    o_ref[...] = (acc + b_ref[...]).astype(o_ref.dtype)


# ---------------------------------------------------------------------------
# Tile sizing
# ---------------------------------------------------------------------------
_VMEM_BLOCK_BUDGET = 32 * 1024 * 1024   # working set for double-buffered x+out
_VMEM_LIMIT_BYTES = 48 * 1024 * 1024    # scoped limit we request (< v7x 64 MiB)
_MIN_GRID_STEPS = 4                     # keep both v7x TCs + pipeline busy


def _pick_spatial_tile(S, N, cin, cout, itemsize):
    """Largest lane tile whose double-buffered in+out blocks fit the VMEM budget,
    accounting for sublane padding, while keeping >= _MIN_GRID_STEPS grid steps."""
    sublane = max(8, 32 // max(1, itemsize))         # 8 for f32, 16 for bf16
    cin_p = -(-cin // sublane) * sublane
    cout_p = -(-cout // sublane) * sublane
    # Double-buffered x block + out block dominate; weight/bias blocks are
    # tiny (<= tens of KiB) and covered by the headroom below _VMEM_LIMIT_BYTES.
    per_col = 2 * (cin_p + cout_p) * itemsize
    ts = _VMEM_BLOCK_BUDGET // max(per_col, 1)

    # Ensure enough grid steps for megacore sharding / pipelining.
    if N < _MIN_GRID_STEPS:
        want_tiles = -(-_MIN_GRID_STEPS // N)
        ts = min(ts, -(-S // want_tiles))

    ts = max(128, (ts // 128) * 128)                 # lane-aligned
    s_aligned = -(-S // 128) * 128
    return min(ts, s_aligned)


# ---------------------------------------------------------------------------
# Wrapper
# ---------------------------------------------------------------------------
def outconv3d_forward(params, x_ncdhw):
    # x_ncdhw: (N, Cin, D, H, W)  ->  (N, Cout, D, H, W)
    N, Cin, D, H, W = x_ncdhw.shape
    w = params["w"]                                  # (Cout, Cin)
    b = params["b"]                                  # (Cout,)
    Cout = w.shape[0]

    S = D * H * W
    x2 = x_ncdhw.reshape(N, Cin, S)

    ts = _pick_spatial_tile(S, N, Cin, Cout, x2.dtype.itemsize)
    n_tiles = pl.cdiv(S, ts)

    out2 = pl.pallas_call(
        _pointwise_conv_kernel,
        out_shape=jax.ShapeDtypeStruct((N, Cout, S), x_ncdhw.dtype),
        grid=(N, n_tiles),
        in_specs=[
            pl.BlockSpec((None, Cin, ts), lambda n, j: (n, 0, j)),   # x tile
            pl.BlockSpec((Cout, Cin), lambda n, j: (0, 0)),          # weights (resident)
            pl.BlockSpec((Cout, 1), lambda n, j: (0, 0)),            # bias
        ],
        out_specs=pl.BlockSpec((None, Cout, ts), lambda n, j: (n, 0, j)),
        compiler_params=pltpu.CompilerParams(
            dimension_semantics=("parallel", "parallel"),
            vmem_limit_bytes=_VMEM_LIMIT_BYTES),
    )(x2, w, b.reshape(Cout, 1))

    return out2.reshape(N, Cout, D, H, W)


outconv3d_forward = jax.jit(outconv3d_forward)


# ---------------------------------------------------------------------------
# Params (PyTorch Conv3d default init, kernel_size=1 -> fan_in = in_ch)
# ---------------------------------------------------------------------------
def init_outconv3d_params(key, in_ch, out_ch):
    in_ch, out_ch = max(1, in_ch), max(1, out_ch)
    kw, kb = jax.random.split(key)
    bound = 1.0 / math.sqrt(in_ch)
    w = jax.random.uniform(kw, (out_ch, in_ch), jnp.float32, -bound, bound)
    b = jax.random.uniform(kb, (out_ch,), jnp.float32, -bound, bound)
    return {"w": w, "b": b}


# ---------------------------------------------------------------------------
# Pure-JAX reference (correctness check only)
# ---------------------------------------------------------------------------
def _ref_forward(params, x_ncdhw):
    w, b = params["w"], params["b"]
    y = jnp.einsum("oc,ncdhw->nodhw", w, x_ncdhw.astype(jnp.float32))
    return y + b[None, :, None, None, None]


if __name__ == "__main__":
    key = jax.random.PRNGKey(0)
    kx, kp, kx2 = jax.random.split(key, 3)

    N, C_IN, C_OUT = 2, 4, 8
    params = init_outconv3d_params(kp, C_IN, C_OUT)

    # Main shape: S = 8*16*16 = 2048 (divides the tile evenly).
    D, H, W = 8, 16, 16
    x = jax.random.normal(kx, (N, C_IN, D, H, W), dtype=jnp.float32)
    out = jax.block_until_ready(outconv3d_forward(params, x))
    ref = jax.block_until_ready(_ref_forward(params, x))
    assert out.shape == (N, C_OUT, D, H, W), out.shape
    np.testing.assert_allclose(np.asarray(out), np.asarray(ref), rtol=1e-4, atol=1e-4)

    # Ragged-tail shape: S = 5*6*7 = 210 exercises the partial boundary block
    # (no wrapper-side pad/slice).
    D2, H2, W2 = 5, 6, 7
    x_tail = jax.random.normal(kx2, (N, C_IN, D2, H2, W2), dtype=jnp.float32)
    out_tail = jax.block_until_ready(outconv3d_forward(params, x_tail))
    ref_tail = jax.block_until_ready(_ref_forward(params, x_tail))
    assert out_tail.shape == (N, C_OUT, D2, H2, W2), out_tail.shape
    np.testing.assert_allclose(np.asarray(out_tail), np.asarray(ref_tail),
                               rtol=1e-4, atol=1e-4)

    print("KERNEL_OK")
</pallas_src>

<mosaic_0001>
module attributes {stable_mosaic.version = 11 : i64} {
  func.func @_pointwise_conv_kernel(%arg0: i32, %arg1: i32, %arg2: memref<1x4x1024xf32, #tpu.memory_space<vmem>>, %arg3: memref<8x4xf32, #tpu.memory_space<vmem>>, %arg4: memref<8x1xf32, #tpu.memory_space<vmem>>, %arg5: memref<1x8x1024xf32, #tpu.memory_space<vmem>>) attributes {dimension_semantics = [#tpu.dimension_semantics<parallel>, #tpu.dimension_semantics<parallel>], iteration_bounds = array<i64: 2, 2>, scalar_prefetch = 0 : i64, scratch_operands = 0 : i64, tpu.core_type = #tpu.core_type<tc>, window_params = [{transform_indices = @transform_0, window_bounds = array<i64: 1, 4, 1024>}, {pipeline_mode = #tpu.pipeline_mode<synchronous>, transform_indices = @transform_1, window_bounds = array<i64: 8, 4>}, {pipeline_mode = #tpu.pipeline_mode<synchronous>, transform_indices = @transform_2, window_bounds = array<i64: 8, 1>}, {transform_indices = @transform_3, window_bounds = array<i64: 1, 8, 1024>}]} {
    %c0 = arith.constant 0 : index
    %c0_0 = arith.constant 0 : index
    %0 = vector.load %arg3[%c0, %c0_0] : memref<8x4xf32, #tpu.memory_space<vmem>>, vector<8x4xf32>
    %c0_1 = arith.constant 0 : index
    %c0_2 = arith.constant 0 : index
    %c0_3 = arith.constant 0 : index
    %1 = vector.load %arg2[%c0_1, %c0_2, %c0_3] : memref<1x4x1024xf32, #tpu.memory_space<vmem>>, vector<1x4x1024xf32>
    %2 = vector.shape_cast %1 : vector<1x4x1024xf32> to vector<4x1024xf32>
    %cst = arith.constant dense<0.000000e+00> : vector<8x1024xf32>
    %3 = tpu.matmul %0, %2, %cst {dimension_numbers = #tpu.dot_dimension_numbers<[1], [0], [0], [1], [0, 0, 1, 1], [], []>} : vector<8x4xf32>, vector<4x1024xf32>, vector<8x1024xf32> -> vector<8x1024xf32>
    %c0_4 = arith.constant 0 : index
    %c0_5 = arith.constant 0 : index
    %4 = vector.load %arg4[%c0_4, %c0_5] : memref<8x1xf32, #tpu.memory_space<vmem>>, vector<8x1xf32>
    %5 = vector.broadcast %4 : vector<8x1xf32> to vector<8x1024xf32>
    %6 = arith.addf %3, %5 : vector<8x1024xf32>
    %c0_6 = arith.constant 0 : index
    %c0_7 = arith.constant 0 : index
    %c0_8 = arith.constant 0 : index
    %7 = vector.load %arg5[%c0_6, %c0_7, %c0_8] : memref<1x8x1024xf32, #tpu.memory_space<vmem>>, vector<1x8x1024xf32>
    %8 = vector.shape_cast %7 : vector<1x8x1024xf32> to vector<8x1024xf32>
    %9 = vector.shape_cast %6 : vector<8x1024xf32> to vector<1x8x1024xf32>
    tpu.vector_store %arg5[%c0_6, %c0_7, %c0_8], %9 {strides = array<i32>} : memref<1x8x1024xf32, #tpu.memory_space<vmem>>, vector<1x8x1024xf32>,
    return
  }
  func.func @transform_0(%arg0: i32, %arg1: i32) -> (i32, i32, i32) {
    %c0_i32 = arith.constant 0 : i32
    %c0_i32_0 = arith.constant 0 : i32
    return %arg0, %c0_i32, %arg1 : i32, i32, i32
  }
  func.func @transform_1(%arg0: i32, %arg1: i32) -> (i32, i32) {
    %c0_i32 = arith.constant 0 : i32
    %c0_i32_0 = arith.constant 0 : i32
    %c0_i32_1 = arith.constant 0 : i32
    return %c0_i32, %c0_i32_0 : i32, i32
  }
  func.func @transform_2(%arg0: i32, %arg1: i32) -> (i32, i32) {
    %c0_i32 = arith.constant 0 : i32
    %c0_i32_0 = arith.constant 0 : i32
    %c0_i32_1 = arith.constant 0 : i32
    return %c0_i32, %c0_i32_0 : i32, i32
  }
  func.func @transform_3(%arg0: i32, %arg1: i32) -> (i32, i32, i32) {
    %c0_i32 = arith.constant 0 : i32
    %c0_i32_0 = arith.constant 0 : i32
    return %arg0, %c0_i32, %arg1 : i32, i32, i32
  }
}

</mosaic_0001>

<llo_original>
// kernel: outconv3d_forward.1
$region0: #{outconv3d_forward.1}
  #allocation0 [shape = 'u32[]', space=smem, size = 0x4, offset = 0x4, fixed_abs, tag = 'smem constant byte address 0x4 - core index']
  #allocation1 [shape = 'u32[144,128]{1,0:T(1,128)}', space=vmem, size = 0x12000, scoped, tag = 'internal scratch']
  %s0 = inlined_call_operand.vmem [shape: f32[2,4,2048], index: 0, kind: input, shape index: {}]
  %s1 = inlined_call_operand.vmem [shape: f32[8,4], index: 1, kind: input, shape index: {}]
  %s2 = inlined_call_operand.vmem [shape: f32[8,1], index: 2, kind: input, shape index: {}]
  %s3 = inlined_call_operand.vmem [shape: f32[2,8,2048], index: 3, kind: output, shape index: {}]
  %s4 = sld [smem:[#allocation0]]
  $region45: #{outconv3d_forward.1} parent=0
    _
  %s6 = ssub.s32 1, %s4
  %s7 = scalar_select 0, %s6, %s4
  loop: start=0, step=1, limit=6
  $region2: #{outconv3d_forward.1} parent=0 // loop_pre_header
    _
  $region3: #{outconv3d_forward.1} parent=0 // loop_header
    %s9 = sphi 0, %s13
    %p10 = scmp.ge.s32.totalorder %s9, 6
    %s16 = sphi 0, %s28
    %s17 = sphi 0, %s24
    %s18 = sphi 0, %s16
    %s19 = sphi 0, %s17
    %s20 = sphi 0, %s18
    %s21 = sphi 0, %s19
    %s33 = sphi 0, %s35
    %s36 = sphi 0, %s33
    %s37 = sphi 0, %s36
    %s53 = sphi 0, %s37
    %s57 = sphi 0, %s57
    %s59 = sphi 0, %s57
    %s60 = sphi 0, %s59
    %s74 = sphi 0, %s60
    %s78 = sphi 0, %s78
    %s80 = sphi 0, %s78
    %s81 = sphi 0, %s80
    %s95 = sphi 0, %s81
    %s103 = sphi 0, %s105
    %s106 = sphi 0, %s103
    %s107 = sphi 0, %s106
    %s123 = sphi 0, %s107
  $region4: #{outconv3d_forward.1} parent=0 // loop_header_branch
    %12 = sbr.rel (%p10) target = $region8
  $region5: #{outconv3d_forward.1} parent=0 // loop_body
    %s14 = ssub.s32 %s9, 1
    %s15 = ssub.s32 %s9, 2
    %s22 = sadd.s32 1, %s17
    %p23 = scmp.ge.s32.totalorder %s22, 2
    %s24 = scalar_select %p23, 0, %s22
    %s25 = sadd.s32 1, %s16
    %s26 = scalar_select %p23, %s25, %s16
    %p27 = scmp.ge.s32.totalorder %s26, 2
    %s28 = scalar_select %p27, 0, %s26
    %s29 = ssub.s32 %s16, %s28
    %s30 = ssub.s32 %s17, %s24
    %s31 = sor.u32 %s29, %s30
    %p32 = scmp.eq.s32.totalorder %s31, 0
    %s34 = sadd.s32 %s33, 1
    %s35 = scalar_select %p32, %s33, %s34
    %p38 = pneg %p32
    %p39 = scmp.eq.s32.totalorder %s9, 3
    %p40 = por %p38, %p39
    %p41 = scmp.ne.s32.totalorder %s33, %s36
    %p42 = scmp.eq.s32.totalorder %s9, 0
    %p43 = por %p41, %p42
    %p44 = scmp.ne.s32.totalorder %s33, %s36
    %p45 = scmp.eq.s32.totalorder %s14, 3
    %p46 = por %p44, %p45
    %p47 = scmp.ne.s32.totalorder %s36, %s37
    %p48 = scmp.eq.s32.totalorder %s14, 0
    %p49 = por %p47, %p48
    %p50 = scmp.ne.s32.totalorder %s36, %s37
    %p51 = scmp.eq.s32.totalorder %s15, 3
    %p52 = por %p50, %p51
    %p54 = scmp.ne.s32.totalorder %s37, %s53
    %p55 = scmp.eq.s32.totalorder %s15, 0
    %p56 = por %p54, %p55
    %s58 = sadd.s32 %s57, 1
    %p61 = scmp.eq.s32.totalorder %s9, 3
    %p62 = scmp.ne.s32.totalorder %s57, %s59
    %p63 = scmp.eq.s32.totalorder %s9, 0
    %p64 = por %p62, %p63
    %p65 = scmp.ne.s32.totalorder %s57, %s59
    %p66 = scmp.eq.s32.totalorder %s14, 3
    %p67 = por %p65, %p66
    %p68 = scmp.ne.s32.totalorder %s59, %s60
    %p69 = scmp.eq.s32.totalorder %s14, 0
    %p70 = por %p68, %p69
    %p71 = scmp.ne.s32.totalorder %s59, %s60
    %p72 = scmp.eq.s32.totalorder %s15, 3
    %p73 = por %p71, %p72
    %p75 = scmp.ne.s32.totalorder %s60, %s74
    %p76 = scmp.eq.s32.totalorder %s15, 0
    %p77 = por %p75, %p76
    %s79 = sadd.s32 %s78, 1
    %p82 = scmp.eq.s32.totalorder %s9, 3
    %p83 = scmp.ne.s32.totalorder %s78, %s80
    %p84 = scmp.eq.s32.totalorder %s9, 0
    %p85 = por %p83, %p84
    %p86 = scmp.ne.s32.totalorder %s78, %s80
    %p87 = scmp.eq.s32.totalorder %s14, 3
    %p88 = por %p86, %p87
    %p89 = scmp.ne.s32.totalorder %s80, %s81
    %p90 = scmp.eq.s32.totalorder %s14, 0
    %p91 = por %p89, %p90
    %p92 = scmp.ne.s32.totalorder %s80, %s81
    %p93 = scmp.eq.s32.totalorder %s15, 3
    %p94 = por %p92, %p93
    %p96 = scmp.ne.s32.totalorder %s81, %s95
    %p97 = scmp.eq.s32.totalorder %s15, 0
    %p98 = por %p96, %p97
    %s99 = ssub.s32 %s16, %s28
    %s100 = ssub.s32 %s17, %s24
    %s101 = sor.u32 %s99, %s100
    %p102 = scmp.eq.s32.totalorder %s101, 0
    %s104 = sadd.s32 %s103, 1
    %s105 = scalar_select %p102, %s103, %s104
    %p108 = pneg %p102
    %p109 = scmp.eq.s32.totalorder %s9, 3
    %p110 = por %p108, %p109
    %p111 = scmp.ne.s32.totalorder %s103, %s106
    %p112 = scmp.eq.s32.totalorder %s9, 0
    %p113 = por %p111, %p112
    %p114 = scmp.ne.s32.totalorder %s103, %s106
    %p115 = scmp.eq.s32.totalorder %s14, 3
    %p116 = por %p114, %p115
    %p117 = scmp.ne.s32.totalorder %s106, %s107
    %p118 = scmp.eq.s32.totalorder %s14, 0
    %p119 = por %p117, %p118
    %p120 = scmp.ne.s32.totalorder %s106, %s107
    %p121 = scmp.eq.s32.totalorder %s15, 3
    %p122 = por %p120, %p121
    %p124 = scmp.ne.s32.totalorder %s107, %s123
    %p125 = scmp.eq.s32.totalorder %s15, 0
    %p126 = por %p124, %p125
    %p127 = scmp.le.s32.totalorder 1, %s9
    %p128 = scmp.lt.s32.totalorder %s9, 5
    %p129 = pnand %p127, %p128
    %p130 = pneg %p129
    // Predicated region
    $region9: #{outconv3d_forward.1} parent=5 // pred_check
      _
    $region10: #{outconv3d_forward.1} parent=5 // pred_check_branch
      %132 = sbr.rel (%p129) target = $region12
    $region11: #{outconv3d_forward.1} parent=5 // pred_region
      %s133 = ssub.s32 %s9, 1
      // Predicated region
      $region13: #{outconv3d_forward.1} parent=11 // pred_check
        %p134 = pneg %p70
      $region14: #{outconv3d_forward.1} parent=11 // pred_check_branch
        %136 = sbr.rel (%p134) target = $region16
      $region15: #{outconv3d_forward.1} parent=11 // pred_region
        _
      $region16: #{outconv3d_forward.1} parent=11 // pred_fallthru
        _
      // Predicated region
      $region17: #{outconv3d_forward.1} parent=11 // pred_check
        %p137 = pneg %p91
      $region18: #{outconv3d_forward.1} parent=11 // pred_check_branch
        %139 = sbr.rel (%p137) target = $region20
      $region19: #{outconv3d_forward.1} parent=11 // pred_region
        _
      $region20: #{outconv3d_forward.1} parent=11 // pred_fallthru
        _
    $region12: #{outconv3d_forward.1} parent=5 // pred_fallthru
      _
    %p140 = scmp.lt.s32.totalorder %s9, 4
    // Predicated region
    $region21: #{outconv3d_forward.1} parent=5 // pred_check
      %p141 = pneg %p140
    $region22: #{outconv3d_forward.1} parent=5 // pred_check_branch
      %143 = sbr.rel (%p141) target = $region24
    $region23: #{outconv3d_forward.1} parent=5 // pred_region
      // Predicated region
      $region25: #{outconv3d_forward.1} parent=23 // pred_check
        %p144 = pneg %p43
      $region26: #{outconv3d_forward.1} parent=23 // pred_check_branch
        %146 = sbr.rel (%p144) target = $region28
      $region27: #{outconv3d_forward.1} parent=23 // pred_region
        %s147 = smul.u32 8, %s17
        %p148 = scmp.lt.s32.totalorder %s16, 1
        %s149 = scalar_select %p148, %s16, 1
        %p150 = scmp.lt.s32.totalorder %s147, 15
        %s151 = scalar_select %p150, %s147, 15
        %s152 = smul.addr %s149, 16
        %s153 = sadd.s32 %s151, %s152
        %s154 = smul.addr %s153, 4
        %s155 = scalar_lea.vmem %s0, %s154
        %s156 = smul.u32 8, %s17
      $region28: #{outconv3d_forward.1} parent=23 // pred_fallthru
        _
    $region24: #{outconv3d_forward.1} parent=5 // pred_fallthru
      _
    %p157 = scmp.le.s32.totalorder 1, %s9
    %p158 = scmp.lt.s32.totalorder %s9, 5
    %p159 = pnand %p157, %p158
    %p160 = pneg %p159
    // Predicated region
    $region29: #{outconv3d_forward.1} parent=5 // pred_check
      _
    $region30: #{outconv3d_forward.1} parent=5 // pred_check_branch
      %162 = sbr.rel (%p159) target = $region32
    $region31: #{outconv3d_forward.1} parent=5 // pred_region
      %s163 = ssub.s32 %s9, 1
      %s164 = smul.u32 8, %s19
      %p165 = scmp.lt.s32.totalorder %s18, 1
      %s166 = scalar_select %p165, %s18, 1
      %p167 = scmp.lt.s32.totalorder %s164, 15
      %s168 = scalar_select %p167, %s164, 15
      %s169 = smul.addr %s166, 16
      %s170 = sadd.s32 %s168, %s169
      %s171 = smul.addr %s170, 4
      %s172 = scalar_lea.vmem %s0, %s171
      %p173 = pneg %p49
      %p174 = pneg %p46
      %p175 = pneg %p70
      %p176 = pneg %p67
      %p177 = pneg %p91
      %p178 = pneg %p88
      %p179 = pneg %p119
      %p180 = pneg %p116
      %s181 = smul.u32 8, %s19
      %p182 = scmp.lt.s32.totalorder %s18, 1
      %s183 = scalar_select %p182, %s18, 1
      %p184 = scmp.lt.s32.totalorder %s181, 15
      %s185 = scalar_select %p184, %s181, 15
      %s186 = smul.addr %s183, 16
      %s187 = sadd.s32 %s185, %s186
      %s188 = smul.addr %s187, 8
      %s189 = scalar_lea.vmem %s3, %s188
      %s190 = smul.u32 8, %s19
      %p191 = scmp.lt.s32.totalorder %s18, 1
      %s192 = scalar_select %p191, %s18, 1
      %p193 = scmp.lt.s32.totalorder %s190, 15
      %s194 = scalar_select %p193, %s190, 15
      %s195 = smul.addr %s192, 16
      %s196 = sadd.s32 %s194, %s195
      %s197 = smul.addr %s196, 4
      %s198 = scalar_lea.vmem %s0, %s197
      %s199 = smul.u32 8, %s19
      %s200 = smul.u32 8, %s19
      %p201 = scmp.lt.s32.totalorder %s18, 1
      %s202 = scalar_select %p201, %s18, 1
      %p203 = scmp.lt.s32.totalorder %s200, 15
      %s204 = scalar_select %p203, %s200, 15
      %s205 = smul.addr %s202, 16
      %s206 = sadd.s32 %s204, %s205
      %s207 = smul.addr %s206, 8
      %s208 = scalar_lea.vmem %s3, %s207
      %s209 = smul.u32 8, %s19
      %v210 = vld [vmem:[%s1] sm:$0xff]
      %v211 = vld [vmem:[%s198] sm:$0xff]
      %v212 = vld [vmem:[%s198 + $0x8] sm:$0xff]
      %v213 = vld [vmem:[%s198 + $0x10] sm:$0xff]
      %v214 = vld [vmem:[%s198 + $0x18] sm:$0xff]
      %v215 = vld [vmem:[%s2] sm:$0xff]
      %217 = vset.pattern.permute.xlu0 0
      %218 = vperm.xlu0 %217, %v215
      %v219 = vpop.permute.xlu0 %218
      %v225 = vcombine.high %v211, %v211
      %v226 = vcombine.high %v212, %v212
      %v227 = vcombine.high %v213, %v213
      %v228 = vcombine.high %v214, %v214
      %vm229 = vcmask 31744
      %v231 = vsel %vm229, %v210, 0
      %vm233 = vcmask 1043456
      %v234 = vsel %vm233, %v211, 0
      %v236 = vsel %vm233, %v225, 0
      %v238 = vsel %vm233, %v212, 0
      %v240 = vsel %vm233, %v226, 0
      %v242 = vsel %vm233, %v213, 0
      %v244 = vsel %vm233, %v227, 0
      %v246 = vsel %vm233, %v214, 0
      %v248 = vsel %vm233, %v228, 0
      %250 = vmatprep.subr.mxu0 %v236
      %251 = vmatpush1.msra.mxu0 %v234
      %252 = vmatprep.subr.mxu0 0.0
      %253 = vmatpush1.msra.mxu0 0.0
      %254 = vmatprep.subr.mxu0 0.0
      %255 = vmatpush1.msra.mxu0 0.0
      %256 = vmatprep.subr.mxu0 0.0
      %257 = vmatpush1.msra.mxu0 0.0
      %258 = vmatprep.subr.mxu0 0.0
      %259 = vmatpush1.msra.mxu0 0.0
      %260 = vmatprep.subr.mxu0 0.0
      %261 = vmatpush1.msra.mxu0 0.0
      %262 = vmatprep.subr.mxu0 0.0
      %263 = vmatpush1.msra.mxu0 0.0
      %264 = vmatprep.subr.mxu0 0.0
      %265 = vmatpush1.msra.mxu0 0.0
      %266 = vmatprep.subr.mxu0 0.0
      %267 = vmatpush1.msra.mxu0 0.0
      %268 = vmatprep.subr.mxu0 0.0
      %269 = vmatpush1.msra.mxu0 0.0
      %270 = vmatprep.subr.mxu0 0.0
      %271 = vmatpush1.msra.mxu0 0.0
      %272 = vmatprep.subr.mxu0 0.0
      %273 = vmatpush1.msra.mxu0 0.0
      %274 = vmatprep.subr.mxu0 0.0
      %275 = vmatpush1.msra.mxu0 0.0
      %276 = vmatprep.subr.mxu0 0.0
      %277 = vmatpush1.msra.mxu0 0.0
      %278 = vmatprep.subr.mxu0 0.0
      %279 = vmatpush1.msra.mxu0 0.0
      %280 = vmatprep.subr.mxu0 0.0
      %281 = vmatpush1.msra.mxu0 0.0
      %282 = vmatprep.subr.mxu0 0.0
      %283 = vmatpush1.msra.mxu0 0.0
      %284 = vmatprep.subr.mxu0 0.0
      %285 = vmatpush1.msra.mxu0 0.0
      %286 = vmatprep.subr.mxu0 0.0
      %287 = vmatpush1.msra.mxu0 0.0
      %288 = vmatprep.subr.mxu0 0.0
      %289 = vmatpush1.msra.mxu0 0.0
      %290 = vmatprep.subr.mxu0 0.0
      %291 = vmatpush1.msra.mxu0 0.0
      %292 = vmatprep.subr.mxu0 0.0
      %293 = vmatpush1.msra.mxu0 0.0
      %294 = vmatprep.subr.mxu0 0.0
      %295 = vmatpush1.msra.mxu0 0.0
      %296 = vmatprep.subr.mxu0 0.0
      %297 = vmatpush1.msra.mxu0 0.0
      %298 = vmatprep.subr.mxu0 0.0
      %299 = vmatpush1.msra.mxu0 0.0
      %300 = vmatprep.subr.mxu0 0.0
      %301 = vmatpush1.msra.mxu0 0.0
      %302 = vmatprep.subr.mxu0 0.0
      %303 = vmatpush1.msra.mxu0 0.0
      %304 = vmatprep.subr.mxu0 0.0
      %305 = vmatpush1.msra.mxu0 0.0
      %306 = vmatprep.subr.mxu0 0.0
      %307 = vmatpush1.msra.mxu0 0.0
      %308 = vmatprep.subr.mxu0 0.0
      %309 = vmatpush1.msra.mxu0 0.0
      %310 = vmatprep.subr.mxu0 0.0
      %311 = vmatpush1.msra.mxu0 0.0
      %312 = vmatprep.subr.mxu0 0.0
      %313 = vmatpush1.msra.mxu0 0.0
      %314 = vmatprep.mubr.f32.mxu0 0.0
      %315 = vmatmul.mubr.f32.gmra.mrb[0].mxu0 %v231
      %v316 = vpop.f32.mrb[0].mxu0
      %v317 = vadd.f32 %v219, %v316
      %v318 = vpop.f32.mrb[0].mxu0
      %v319 = vadd.f32 %v219, %v318
      %320 = vdwg.mxu0
      %321 = vmatprep.subr.mxu0 %v240
      %322 = vmatpush1.msra.mxu0 %v238
      %323 = vmatprep.subr.mxu0 0.0
      %324 = vmatpush1.msra.mxu0 0.0
      %325 = vmatprep.subr.mxu0 0.0
      %326 = vmatpush1.msra.mxu0 0.0
      %327 = vmatprep.subr.mxu0 0.0
      %328 = vmatpush1.msra.mxu0 0.0
      %329 = vmatprep.subr.mxu0 0.0
      %330 = vmatpush1.msra.mxu0 0.0
      %331 = vmatprep.subr.mxu0 0.0
      %332 = vmatpush1.msra.mxu0 0.0
      %333 = vmatprep.subr.mxu0 0.0
      %334 = vmatpush1.msra.mxu0 0.0
      %335 = vmatprep.subr.mxu0 0.0
      %336 = vmatpush1.msra.mxu0 0.0
      %337 = vmatprep.subr.mxu0 0.0
      %338 = vmatpush1.msra.mxu0 0.0
      %339 = vmatprep.subr.mxu0 0.0
      %340 = vmatpush1.msra.mxu0 0.0
      %341 = vmatprep.subr.mxu0 0.0
      %342 = vmatpush1.msra.mxu0 0.0
      %343 = vmatprep.subr.mxu0 0.0
      %344 = vmatpush1.msra.mxu0 0.0
      %345 = vmatprep.subr.mxu0 0.0
      %346 = vmatpush1.msra.mxu0 0.0
      %347 = vmatprep.subr.mxu0 0.0
      %348 = vmatpush1.msra.mxu0 0.0
      %349 = vmatprep.subr.mxu0 0.0
      %350 = vmatpush1.msra.mxu0 0.0
      %351 = vmatprep.subr.mxu0 0.0
      %352 = vmatpush1.msra.mxu0 0.0
      %353 = vmatprep.subr.mxu0 0.0
      %354 = vmatpush1.msra.mxu0 0.0
      %355 = vmatprep.subr.mxu0 0.0
      %356 = vmatpush1.msra.mxu0 0.0
      %357 = vmatprep.subr.mxu0 0.0
      %358 = vmatpush1.msra.mxu0 0.0
      %359 = vmatprep.subr.mxu0 0.0
      %360 = vmatpush1.msra.mxu0 0.0
      %361 = vmatprep.subr.mxu0 0.0
      %362 = vmatpush1.msra.mxu0 0.0
      %363 = vmatprep.subr.mxu0 0.0
      %364 = vmatpush1.msra.mxu0 0.0
      %365 = vmatprep.subr.mxu0 0.0
      %366 = vmatpush1.msra.mxu0 0.0
      %367 = vmatprep.subr.mxu0 0.0
      %368 = vmatpush1.msra.mxu0 0.0
      %369 = vmatprep.subr.mxu0 0.0
      %370 = vmatpush1.msra.mxu0 0.0
      %371 = vmatprep.subr.mxu0 0.0
      %372 = vmatpush1.msra.mxu0 0.0
      %373 = vmatprep.subr.mxu0 0.0
      %374 = vmatpush1.msra.mxu0 0.0
      %375 = vmatprep.subr.mxu0 0.0
      %376 = vmatpush1.msra.mxu0 0.0
      %377 = vmatprep.subr.mxu0 0.0
      %378 = vmatpush1.msra.mxu0 0.0
      %379 = vmatprep.subr.mxu0 0.0
      %380 = vmatpush1.msra.mxu0 0.0
      %381 = vmatprep.subr.mxu0 0.0
      %382 = vmatpush1.msra.mxu0 0.0
      %383 = vmatprep.subr.mxu0 0.0
      %384 = vmatpush1.msra.mxu0 0.0
      %385 = vmatprep.mubr.f32.mxu0 0.0
      %386 = vmatmul.mubr.f32.gmra.mrb[0].mxu0 %v231
      %v387 = vpop.f32.mrb[0].mxu0
      %v388 = vadd.f32 %v219, %v387
      %v389 = vpop.f32.mrb[0].mxu0
      %v390 = vadd.f32 %v219, %v389
      %391 = vdwg.mxu0
      %392 = vmatprep.subr.mxu0 %v244
      %393 = vmatpush1.msra.mxu0 %v242
      %394 = vmatprep.subr.mxu0 0.0
      %395 = vmatpush1.msra.mxu0 0.0
      %396 = vmatprep.subr.mxu0 0.0
      %397 = vmatpush1.msra.mxu0 0.0
      %398 = vmatprep.subr.mxu0 0.0
      %399 = vmatpush1.msra.mxu0 0.0
      %400 = vmatprep.subr.mxu0 0.0
      %401 = vmatpush1.msra.mxu0 0.0
      %402 = vmatprep.subr.mxu0 0.0
      %403 = vmatpush1.msra.mxu0 0.0
      %404 = vmatprep.subr.mxu0 0.0
      %405 = vmatpush1.msra.mxu0 0.0
      %406 = vmatprep.subr.mxu0 0.0
      %407 = vmatpush1.msra.mxu0 0.0
      %408 = vmatprep.subr.mxu0 0.0
      %409 = vmatpush1.msra.mxu0 0.0
      %410 = vmatprep.subr.mxu0 0.0
      %411 = vmatpush1.msra.mxu0 0.0
      %412 = vmatprep.subr.mxu0 0.0
      %413 = vmatpush1.msra.mxu0 0.0
      %414 = vmatprep.subr.mxu0 0.0
      %415 = vmatpush1.msra.mxu0 0.0
      %416 = vmatprep.subr.mxu0 0.0
      %417 = vmatpush1.msra.mxu0 0.0
      %418 = vmatprep.subr.mxu0 0.0
      %419 = vmatpush1.msra.mxu0 0.0
      %420 = vmatprep.subr.mxu0 0.0
      %421 = vmatpush1.msra.mxu0 0.0
      %422 = vmatprep.subr.mxu0 0.0
      %423 = vmatpush1.msra.mxu0 0.0
      %424 = vmatprep.subr.mxu0 0.0
      %425 = vmatpush1.msra.mxu0 0.0
      %426 = vmatprep.subr.mxu0 0.0
      %427 = vmatpush1.msra.mxu0 0.0
      %428 = vmatprep.subr.mxu0 0.0
      %429 = vmatpush1.msra.mxu0 0.0
      %430 = vmatprep.subr.mxu0 0.0
      %431 = vmatpush1.msra.mxu0 0.0
      %432 = vmatprep.subr.mxu0 0.0
      %433 = vmatpush1.msra.mxu0 0.0
      %434 = vmatprep.subr.mxu0 0.0
      %435 = vmatpush1.msra.mxu0 0.0
      %436 = vmatprep.subr.mxu0 0.0
      %437 = vmatpush1.msra.mxu0 0.0
      %438 = vmatprep.subr.mxu0 0.0
      %439 = vmatpush1.msra.mxu0 0.0
      %440 = vmatprep.subr.mxu0 0.0
      %441 = vmatpush1.msra.mxu0 0.0
      %442 = vmatprep.subr.mxu0 0.0
      %443 = vmatpush1.msra.mxu0 0.0
      %444 = vmatprep.subr.mxu0 0.0
      %445 = vmatpush1.msra.mxu0 0.0
      %446 = vmatprep.subr.mxu0 0.0
      %447 = vmatpush1.msra.mxu0 0.0
      %448 = vmatprep.subr.mxu0 0.0
      %449 = vmatpush1.msra.mxu0 0.0
      %450 = vmatprep.subr.mxu0 0.0
      %451 = vmatpush1.msra.mxu0 0.0
      %452 = vmatprep.subr.mxu0 0.0
      %453 = vmatpush1.msra.mxu0 0.0
      %454 = vmatprep.subr.mxu0 0.0
      %455 = vmatpush1.msra.mxu0 0.0
      %456 = vmatprep.mubr.f32.mxu0 0.0
      %457 = vmatmul.mubr.f32.gmra.mrb[0].mxu0 %v231
      %v458 = vpop.f32.mrb[0].mxu0
      %v459 = vadd.f32 %v219, %v458
      %v460 = vpop.f32.mrb[0].mxu0
      %v461 = vadd.f32 %v219, %v460
      %462 = vdwg.mxu0
      %463 = vmatprep.subr.mxu0 %v248
      %464 = vmatpush1.msra.mxu0 %v246
      %465 = vmatprep.subr.mxu0 0.0
      %466 = vmatpush1.msra.mxu0 0.0
      %467 = vmatprep.subr.mxu0 0.0
      %468 = vmatpush1.msra.mxu0 0.0
      %469 = vmatprep.subr.mxu0 0.0
      %470 = vmatpush1.msra.mxu0 0.0
      %471 = vmatprep.subr.mxu0 0.0
      %472 = vmatpush1.msra.mxu0 0.0
      %473 = vmatprep.subr.mxu0 0.0
      %474 = vmatpush1.msra.mxu0 0.0
      %475 = vmatprep.subr.mxu0 0.0
      %476 = vmatpush1.msra.mxu0 0.0
      %477 = vmatprep.subr.mxu0 0.0
      %478 = vmatpush1.msra.mxu0 0.0
      %479 = vmatprep.subr.mxu0 0.0
      %480 = vmatpush1.msra.mxu0 0.0
      %481 = vmatprep.subr.mxu0 0.0
      %482 = vmatpush1.msra.mxu0 0.0
      %483 = vmatprep.subr.mxu0 0.0
      %484 = vmatpush1.msra.mxu0 0.0
      %485 = vmatprep.subr.mxu0 0.0
      %486 = vmatpush1.msra.mxu0 0.0
      %487 = vmatprep.subr.mxu0 0.0
      %488 = vmatpush1.msra.mxu0 0.0
      %489 = vmatprep.subr.mxu0 0.0
      %490 = vmatpush1.msra.mxu0 0.0
      %491 = vmatprep.subr.mxu0 0.0
      %492 = vmatpush1.msra.mxu0 0.0
      %493 = vmatprep.subr.mxu0 0.0
      %494 = vmatpush1.msra.mxu0 0.0
      %495 = vmatprep.subr.mxu0 0.0
      %496 = vmatpush1.msra.mxu0 0.0
      %497 = vmatprep.subr.mxu0 0.0
      %498 = vmatpush1.msra.mxu0 0.0
      %499 = vmatprep.subr.mxu0 0.0
      %500 = vmatpush1.msra.mxu0 0.0
      %501 = vmatprep.subr.mxu0 0.0
      %502 = vmatpush1.msra.mxu0 0.0
      %503 = vmatprep.subr.mxu0 0.0
      %504 = vmatpush1.msra.mxu0 0.0
      %505 = vmatprep.subr.mxu0 0.0
      %506 = vmatpush1.msra.mxu0 0.0
      %507 = vmatprep.subr.mxu0 0.0
      %508 = vmatpush1.msra.mxu0 0.0
      %509 = vmatprep.subr.mxu0 0.0
      %510 = vmatpush1.msra.mxu0 0.0
      %511 = vmatprep.subr.mxu0 0.0
      %512 = vmatpush1.msra.mxu0 0.0
      %513 = vmatprep.subr.mxu0 0.0
      %514 = vmatpush1.msra.mxu0 0.0
      %515 = vmatprep.subr.mxu0 0.0
      %516 = vmatpush1.msra.mxu0 0.0
      %517 = vmatprep.subr.mxu0 0.0
      %518 = vmatpush1.msra.mxu0 0.0
      %519 = vmatprep.subr.mxu0 0.0
      %520 = vmatpush1.msra.mxu0 0.0
      %521 = vmatprep.subr.mxu0 0.0
      %522 = vmatpush1.msra.mxu0 0.0
      %523 = vmatprep.subr.mxu0 0.0
      %524 = vmatpush1.msra.mxu0 0.0
      %525 = vmatprep.subr.mxu0 0.0
      %526 = vmatpush1.msra.mxu0 0.0
      %527 = vmatprep.mubr.f32.mxu0 0.0
      %528 = vmatmul.mubr.f32.gmra.mrb[0].mxu0 %v231
      %v529 = vpop.f32.mrb[0].mxu0
      %v530 = vadd.f32 %v219, %v529
      %v531 = vpop.f32.mrb[0].mxu0
      %v532 = vadd.f32 %v219, %v531
      %533 = vdwg.mxu0
      %534 = vst [vmem:[%s208] sm:$0xff] %v317
      %535 = vst [vmem:[%s208 + $0x8] sm:$0xff] %v319
      %536 = vst [vmem:[%s208 + $0x10] sm:$0xff] %v388
      %537 = vst [vmem:[%s208 + $0x18] sm:$0xff] %v390
      %538 = vst [vmem:[%s208 + $0x20] sm:$0xff] %v459
      %539 = vst [vmem:[%s208 + $0x28] sm:$0xff] %v461
      %540 = vst [vmem:[%s208 + $0x30] sm:$0xff] %v530
      %541 = vst [vmem:[%s208 + $0x38] sm:$0xff] %v532
      %s542 = smul.u32 8, %s19
      %p543 = scmp.lt.s32.totalorder %s18, 1
      %s544 = scalar_select %p543, %s18, 1
      %p545 = scmp.lt.s32.totalorder %s542, 15
      %s546 = scalar_select %p545, %s542, 15
      %s547 = smul.addr %s544, 16
      %s548 = sadd.s32 %s546, %s547
      %s549 = smul.addr %s548, 8
      %s550 = scalar_lea.vmem %s3, %s549
      // Predicated region
      $region33: #{outconv3d_forward.1} parent=31 // pred_check
        %p551 = pneg %p116
      $region34: #{outconv3d_forward.1} parent=31 // pred_check_branch
        %553 = sbr.rel (%p551) target = $region36
      $region35: #{outconv3d_forward.1} parent=31 // pred_region
        %s554 = smul.u32 8, %s19
      $region36: #{outconv3d_forward.1} parent=31 // pred_fallthru
        _
    $region32: #{outconv3d_forward.1} parent=5 // pred_fallthru
      _
    %p555 = scmp.le.s32.totalorder 2, %s9
    // Predicated region
    $region37: #{outconv3d_forward.1} parent=5 // pred_check
      %p556 = pneg %p555
    $region38: #{outconv3d_forward.1} parent=5 // pred_check_branch
      %558 = sbr.rel (%p556) target = $region40
    $region39: #{outconv3d_forward.1} parent=5 // pred_region
      %s559 = ssub.s32 %s9, 2
      // Predicated region
      $region41: #{outconv3d_forward.1} parent=39 // pred_check
        %p560 = pneg %p122
      $region42: #{outconv3d_forward.1} parent=39 // pred_check_branch
        %562 = sbr.rel (%p560) target = $region44
      $region43: #{outconv3d_forward.1} parent=39 // pred_region
        %s563 = smul.u32 8, %s21
        %p564 = scmp.lt.s32.totalorder %s20, 1
        %s565 = scalar_select %p564, %s20, 1
        %p566 = scmp.lt.s32.totalorder %s563, 15
        %s567 = scalar_select %p566, %s563, 15
        %s568 = smul.addr %s565, 16
        %s569 = sadd.s32 %s567, %s568
        %s570 = smul.addr %s569, 8
        %s571 = scalar_lea.vmem %s3, %s570
      $region44: #{outconv3d_forward.1} parent=39 // pred_fallthru
        _
    $region40: #{outconv3d_forward.1} parent=5 // pred_fallthru
      _
  $region6: #{outconv3d_forward.1} parent=0 // loop_footer
    %s13 = sadd.s32 1, %s9
  $region7: #{outconv3d_forward.1} parent=0 // loop_footer_branch
    %8 = sbr.rel target = $region3
  $region8: #{outconv3d_forward.1} parent=0 // loop_exit
    _

</llo_original>
